<compile_context>
chip_gen: v7x
topology: tpu7x:2x2x1
jax: 0.10.0
libtpu: 0.0.40
codegen_flags: <defaults>
</compile_context>

<pallas_src>
import functools

import jax
import jax.numpy as jnp
from jax.experimental import pallas as pl
from jax.experimental.pallas import tpu as pltpu


@functools.lru_cache(maxsize=1)
def _roll_matches_jnp_roll() -> bool:
    """Probe pltpu.roll's sign convention once with a tiny pallas_call."""
    def k(x_ref, o_ref):
        o_ref[...] = pltpu.roll(x_ref[...], shift=1, axis=1)

    x = jnp.broadcast_to(jnp.arange(128, dtype=jnp.float32), (8, 128))
    out = pl.pallas_call(
        k, out_shape=jax.ShapeDtypeStruct((8, 128), jnp.float32))(x)
    # jnp.roll semantics would put 127 at lane 0.
    return bool(out[0, 0] == 127.0)


def make_c2d_kernel(n_resblocks: int, res_scale: float, Wp: int,
                    roll_sign: int):
    """Build the fused C2D forward kernel (static shapes / hyper-params)."""
    # tap (dy, dx) reads input at flat offset m + (dy-1)*Wp + (dx-1)
    shifts = [(dy - 1) * Wp + (dx - 1) for dy in range(3) for dx in range(3)]

    def kernel(x_ref, mask_ref, mean_in_ref, mean_out_ref,
               head_w_ref, head_b_ref, body_w_ref, body_b_ref,
               tail_w_ref, tail_b_ref, out_ref, col_ref):
        mask = mask_ref[...]               # (1, L): 1 interior, 0 border / pad
        L = mask.shape[1]

        def conv3x3(act, w, b, apply_mask=True):
            # act: (cin, L) lane-dense, zero 1-px border per image slab.
            # w:   (cout, 9*cin) tap-major / channel-minor.   b: (cout, 1).
            cin = act.shape[0]
            # im2col via XLU rolls into a persistent VMEM scratch.  Row block
            # t holds act shifted by s_t; wrap-around lanes only land on
            # border / pad output positions that `mask` zeroes afterwards.
            for t, s in enumerate(shifts):
                rolled = act if s == 0 else pltpu.roll(
                    act, shift=(roll_sign * s) % L, axis=1)
                col_ref[t * cin:(t + 1) * cin, :] = rolled
            y = jnp.dot(w, col_ref[0:9 * cin, :],
                        preferred_element_type=jnp.float32)
            y = y + b
            # re-zero the 1-px border / lane padding so the next conv's taps
            # read exact zeros there (no buffer re-zeroing needed).
            return y * mask if apply_mask else y

        def elu(v):  # nn.ELU(alpha=1)
            return jnp.where(v > 0, v, jnp.exp(jnp.minimum(v, 0.0)) - 1.0)

        # --- sub_mean: x - mean (border / pad kept at exactly zero) ---
        x = (x_ref[...] - mean_in_ref[...]) * mask            # (Cin_p, L)

        # --- head: conv(3*inchannels -> n_feats) ---
        feat = conv3x3(x, head_w_ref[...], head_b_ref[...])

        # --- body: ResBlocks (conv -> ELU -> conv, *res_scale, + input) ---
        cur = feat
        for r in range(n_resblocks):
            h = elu(conv3x3(cur, body_w_ref[2 * r], body_b_ref[2 * r]))
            h = conv3x3(h, body_w_ref[2 * r + 1], body_b_ref[2 * r + 1])
            cur = cur + (h if res_scale == 1.0 else res_scale * h)

        # --- body tail conv + global skip ---
        cur = conv3x3(cur, body_w_ref[2 * n_resblocks],
                      body_b_ref[2 * n_resblocks])
        cur = cur + feat

        # --- tail: conv(n_feats -> 3*outchannels) + Tanh + add_mean ---
        # (no mask needed: border / pad lanes are sliced off in the wrapper)
        t = jnp.tanh(conv3x3(cur, tail_w_ref[...], tail_b_ref[...],
                             apply_mask=False))
        out_ref[...] = t + mean_out_ref[...]

    return kernel


def c2d_pallas(x, params, n_resblocks, res_scale, num_grid_steps=None):
    """x: NHWC float32 (N, H, W, 3*inchannels). Returns NHWC output."""
    N, H, W, Cin = x.shape
    F = params['head_w'].shape[-1]
    Cout = params['tail_w'].shape[-1]
    R = n_resblocks
    Hp, Wp = H + 2, W + 2
    HpWp = Hp * Wp
    HpWp_pad = -(-HpWp // 128) * 128   # lane-pad flat spatial length to x128
    Cin_p = -(-Cin // 8) * 8           # sublane-pad channel dims to x8
    F_p = -(-F // 8) * 8
    Cout_p = -(-Cout // 8) * 8

    # Roll-based im2col invariant: interior tap reads (|shift| <= Wp+1) stay
    # inside the image's own padded slab (covered by the 1-px zero border).
    assert Wp + 1 <= HpWp

    # Grid sizing: v7x has 2 TensorCores -> keep the grid a multiple of 2; on
    # 1-TC v5e/v6e pass num_grid_steps=1 to fold the whole batch into one step
    # (amortizes per-conv fixed cost over N x more lanes).
    if num_grid_steps is None:
        num_grid_steps = 2 if (N % 2 == 0 and N >= 2) else 1
    assert N % num_grid_steps == 0
    ipg = N // num_grid_steps          # images folded per grid step
    L = ipg * HpWp_pad                 # lane length seen by the kernel

    # ---- lane-dense layout prep (wrapper-side; plain XLA ops) ----
    xp = jnp.pad(x, ((0, 0), (1, 1), (1, 1), (0, Cin_p - Cin)))
    x_cf = xp.transpose(0, 3, 1, 2).reshape(N, Cin_p, HpWp)
    x_cf = jnp.pad(x_cf, ((0, 0), (0, 0), (0, HpWp_pad - HpWp)))
    x_flat = (x_cf.reshape(num_grid_steps, ipg, Cin_p, HpWp_pad)
                  .transpose(0, 2, 1, 3)
                  .reshape(num_grid_steps, Cin_p, L))

    # interior mask: 1 inside HxW of each image slab, 0 on border / lane pad
    m1 = jnp.pad(jnp.ones((H, W), jnp.float32), 1).reshape(HpWp)
    m1 = jnp.pad(m1, (0, HpWp_pad - HpWp))
    mask = jnp.tile(m1, (ipg,)).reshape(1, L)

    # weights: HWIO (3,3,ci,co) -> (co_p, 9*ci_p), tap-major / channel-minor
    def flat_w(w, ci_p, co_p):
        ci, co = w.shape[2], w.shape[3]
        w = jnp.pad(w, ((0, 0), (0, 0), (0, ci_p - ci), (0, co_p - co)))
        return w.transpose(3, 0, 1, 2).reshape(co_p, 9 * ci_p)

    def flat_b(b, co_p):
        return jnp.pad(b, (0, co_p - b.shape[0])).reshape(co_p, 1)

    head_w = flat_w(params['head_w'], Cin_p, F_p)              # (F_p, 9*Cin_p)
    tail_w = flat_w(params['tail_w'], F_p, Cout_p)             # (Cout_p, 9*F_p)
    body_w = jnp.stack([flat_w(w, F_p, F_p) for w in params['body_ws']])
    head_b = flat_b(params['head_b'], F_p)
    tail_b = flat_b(params['tail_b'], Cout_p)
    body_b = jnp.stack([flat_b(b, F_p) for b in params['body_bs']])
    mean_in = jnp.pad(params['mean_in'].reshape(Cin, 1),
                      ((0, Cin_p - Cin), (0, 0)))
    mean_out = jnp.pad(params['mean_out'].reshape(Cout, 1),
                       ((0, Cout_p - Cout), (0, 0)))

    roll_sign = -1 if _roll_matches_jnp_roll() else 1
    kernel = make_c2d_kernel(R, float(res_scale), Wp, roll_sign)

    def fixed(*shape):  # whole-array block, same for every grid step
        return pl.BlockSpec(shape, lambda n, _d=len(shape): (0,) * _d)

    Cmax = max(Cin_p, F_p)
    out_flat = pl.pallas_call(
        kernel,
        out_shape=jax.ShapeDtypeStruct((num_grid_steps, Cout_p, L),
                                       jnp.float32),
        grid=(num_grid_steps,),
        in_specs=[
            pl.BlockSpec((None, Cin_p, L), lambda n: (n, 0, 0)),       # x
            fixed(1, L),                                               # mask
            fixed(Cin_p, 1), fixed(Cout_p, 1),                         # means
            fixed(F_p, 9 * Cin_p), fixed(F_p, 1),                      # head
            fixed(2 * R + 1, F_p, 9 * F_p), fixed(2 * R + 1, F_p, 1),  # body
            fixed(Cout_p, 9 * F_p), fixed(Cout_p, 1),                  # tail
        ],
        out_specs=pl.BlockSpec((None, Cout_p, L), lambda n: (n, 0, 0)),
        scratch_shapes=[pltpu.VMEM((9 * Cmax, L), jnp.float32)],       # im2col
        compiler_params=pltpu.CompilerParams(
            dimension_semantics=("parallel",)),
    )(x_flat, mask, mean_in, mean_out, head_w, head_b,
      body_w, body_b, tail_w, tail_b)

    # lane-dense padded slab -> NHWC interior (wrapper-side)
    out = (out_flat.reshape(num_grid_steps, Cout_p, ipg, HpWp_pad)
                   .transpose(0, 2, 1, 3)
                   .reshape(N, Cout_p, HpWp_pad)[:, :Cout, :HpWp]
                   .reshape(N, Cout, Hp, Wp)[:, :, 1:1 + H, 1:1 + W])
    return out.transpose(0, 2, 3, 1)


def c2d_reference(x, params, n_resblocks, res_scale):
    """Pure-JAX reference (lax.conv) for correctness checking."""
    def conv(v, w, b):
        y = jax.lax.conv_general_dilated(
            v, w, (1, 1), 'SAME', dimension_numbers=('NHWC', 'HWIO', 'NHWC'))
        return y + b.reshape(1, 1, 1, -1)

    def elu(v):
        return jnp.where(v > 0, v, jnp.exp(jnp.minimum(v, 0.0)) - 1.0)

    x = x - params['mean_in']
    feat = conv(x, params['head_w'], params['head_b'])
    cur = feat
    for r in range(n_resblocks):
        h = elu(conv(cur, params['body_ws'][2 * r], params['body_bs'][2 * r]))
        h = conv(h, params['body_ws'][2 * r + 1], params['body_bs'][2 * r + 1])
        cur = cur + res_scale * h
    cur = conv(cur, params['body_ws'][2 * n_resblocks],
               params['body_bs'][2 * n_resblocks])
    cur = cur + feat
    t = jnp.tanh(conv(cur, params['tail_w'], params['tail_b']))
    return t + params['mean_out']


if __name__ == "__main__":
    # args: n_resblocks=2, n_feats=8, res_scale=1.0; inchannels=outchannels=1
    inchannels, outchannels = 1, 1
    n_resblocks, n_feats, res_scale = 2, 8, 1.0
    N, H, W = 2, 16, 16
    Cin, Cout = 3 * inchannels, 3 * outchannels

    key = jax.random.PRNGKey(0)
    keys = iter(jax.random.split(key, 32))

    def w_init(k, shape, fan_in):
        return jax.random.normal(k, shape, jnp.float32) / jnp.sqrt(float(fan_in))

    rgb_mean = jnp.array([0.4488, 0.4371, 0.404], jnp.float32)
    params = dict(
        mean_in=jnp.tile(rgb_mean, inchannels).reshape(1, 1, 1, Cin),
        mean_out=jnp.tile(rgb_mean, outchannels).reshape(1, 1, 1, Cout),
        head_w=w_init(next(keys), (3, 3, Cin, n_feats), 9 * Cin),
        head_b=jax.random.normal(next(keys), (n_feats,), jnp.float32) * 0.01,
        body_ws=[w_init(next(keys), (3, 3, n_feats, n_feats), 9 * n_feats)
                 for _ in range(2 * n_resblocks + 1)],
        body_bs=[jax.random.normal(next(keys), (n_feats,), jnp.float32) * 0.01
                 for _ in range(2 * n_resblocks + 1)],
        tail_w=w_init(next(keys), (3, 3, n_feats, Cout), 9 * n_feats),
        tail_b=jax.random.normal(next(keys), (Cout,), jnp.float32) * 0.01,
    )

    x = jax.random.uniform(next(keys), (N, H, W, Cin), jnp.float32)

    out = jax.block_until_ready(c2d_pallas(x, params, n_resblocks, res_scale))
    ref = c2d_reference(x, params, n_resblocks, res_scale)

    assert out.shape == (N, H, W, Cout), out.shape
    max_err = float(jnp.max(jnp.abs(out - ref)))
    assert jnp.allclose(out, ref, atol=1e-3, rtol=1e-3), max_err
    print("KERNEL_OK")
</pallas_src>

<mosaic_0001>
module attributes {stable_mosaic.version = 11 : i64} {
  func.func @k(%arg0: memref<8x128xf32, #tpu.memory_space<vmem>>, %arg1: memref<8x128xf32, #tpu.memory_space<vmem>>) attributes {dimension_semantics = [], scalar_prefetch = 0 : i64, scratch_operands = 0 : i64, tpu.core_type = #tpu.core_type<tc>} {
    %c0 = arith.constant 0 : index
    %c0_0 = arith.constant 0 : index
    %0 = vector.load %arg0[%c0, %c0_0] : memref<8x128xf32, #tpu.memory_space<vmem>>, vector<8x128xf32>
    %c1_i32 = arith.constant 1 : i32
    %1 = tpu.dynamic_rotate %0 by %c1_i32 dim 1 : vector<8x128xf32>, i32 -> vector<8x128xf32>
    %c0_1 = arith.constant 0 : index
    %c0_2 = arith.constant 0 : index
    %2 = vector.load %arg1[%c0_1, %c0_2] : memref<8x128xf32, #tpu.memory_space<vmem>>, vector<8x128xf32>
    tpu.vector_store %arg1[%c0_1, %c0_2], %1 {strides = array<i32>} : memref<8x128xf32, #tpu.memory_space<vmem>>, vector<8x128xf32>,
    return
  }
}

</mosaic_0001>

<llo_original>
// kernel: tpu_custom_call.1
$region0: #{tpu_custom_call.1}
  #allocation0 [shape = 'u32[]', space=smem, size = 0x4, offset = 0x4, fixed_abs, tag = 'smem constant byte address 0x4 - core index']
  #allocation1 [shape = 'u32[144,128]{1,0:T(1,128)}', space=vmem, size = 0x12000, scoped, tag = 'internal scratch']
  %s0 = inlined_call_operand.hbm [shape: f32[8,128], index: 0, kind: input, shape index: {}]
  %s1 = inlined_call_operand.hbm [shape: f32[8,128], index: 1, kind: output, shape index: {}]
  %s2 = sld [smem:[#allocation0]]
  $region18: #{tpu_custom_call.1} parent=0
    _
  %s4 = ssub.s32 1, %s2
  %s5 = scalar_select 0, %s4, %s2
  $region1: #{tpu_custom_call.1} parent=0
    #allocation2 [shape = 'u8[4096]{0}', space=vmem, size = 0x1000, scoped, tag = 'input window, operand 0, single buffered']
    #allocation3 [shape = 's32[1]{0}', space=sflag, size = 0x4, scoped, tag = 'scoped memory for tpu_custom_call.1']
    #allocation4 [shape = 's32[1]{0}', space=sflag, size = 0x4, scoped, tag = 'scoped memory for tpu_custom_call.1']
    #allocation5 [shape = 'u8[4096]{0}', space=vmem, size = 0x1000, scoped, tag = 'output window, operand 0, single buffered']
    %6 = vsyncpa [#allocation3], 0
    %7 = vsyncpa [#allocation4], 0
    // Predicated region
    $region2: #{tpu_custom_call.1} parent=1 // pred_check
      _
    $region3: #{tpu_custom_call.1} parent=1 // pred_check_branch
      %9 = sbr.rel (0) target = $region5
    $region4: #{tpu_custom_call.1} parent=1 // pred_region
      %s11 = ssub.s32 128, 128
      %12 = vsyncadd [#allocation3], %s11
      %s14 = sshll.u32 [#allocation2], 4
      %s15 = int_to_ptr.vmem [resolvable:$true] %s14
      %17 = dma.hbm_to_vmem [thread:$0]  %s0, 128, %s15, [#allocation3]
    $region5: #{tpu_custom_call.1} parent=1 // pred_fallthru
      _
    // Predicated region
    $region6: #{tpu_custom_call.1} parent=1 // pred_check
      _
    $region7: #{tpu_custom_call.1} parent=1 // pred_check_branch
      %19 = sbr.rel (0) target = $region9
    $region8: #{tpu_custom_call.1} parent=1 // pred_region
      %20 = dma.done [#allocation3], 128
    $region9: #{tpu_custom_call.1} parent=1 // pred_fallthru
      _
    %v21 = vld [vmem:[#allocation2] sm:$0xff]
    %22 = vrot.lane.b32.xlu0 %v21, 1
    %v23 = vpop.permute.xlu0 %22
    %24 = vst [vmem:[#allocation5] sm:$0xff] %v23
    // Predicated region
    $region10: #{tpu_custom_call.1} parent=1 // pred_check
      _
    $region11: #{tpu_custom_call.1} parent=1 // pred_check_branch
      %26 = sbr.rel (0) target = $region13
    $region12: #{tpu_custom_call.1} parent=1 // pred_region
      %s28 = ssub.s32 128, 128
      %29 = vsyncadd [#allocation4], %s28
      %s31 = sshll.u32 [#allocation5], 4
      %s32 = int_to_ptr.vmem [resolvable:$true] %s31
      %34 = dma.vmem_to_hbm [thread:$0]  %s32, 128, %s1, [#allocation4]
    $region13: #{tpu_custom_call.1} parent=1 // pred_fallthru
      _
    // Predicated region
    $region14: #{tpu_custom_call.1} parent=1 // pred_check
      _
    $region15: #{tpu_custom_call.1} parent=1 // pred_check_branch
      %36 = sbr.rel (0) target = $region17
    $region16: #{tpu_custom_call.1} parent=1 // pred_region
      %37 = dma.done [#allocation4], 128
    $region17: #{tpu_custom_call.1} parent=1 // pred_fallthru
      _
    %38 = vsyncpa [#allocation3], 1
    %39 = vsyncpa [#allocation4], 1

</llo_original>
